<compile_context>
chip_gen: v7x
topology: tpu7x:2x2x1
jax: 0.10.0
libtpu: 0.0.40
codegen_flags: <defaults>
</compile_context>

<pallas_src>
import functools
import math

import jax
import jax.numpy as jnp
from jax.experimental import pallas as pl
from jax.experimental.pallas import tpu as pltpu


def _pad_up(n, m):
    return ((n + m - 1) // m) * m


def _sublane_multiple(dtype):
    # Sublane packing factor: f32 -> 8, bf16 -> 16, int8/fp8 -> 32.
    return 32 // jnp.dtype(dtype).itemsize


def _apply_activation(y, activation):
    if activation == "relu":
        return jnp.maximum(y, 0.0)
    if activation == "tanh":
        return jnp.tanh(y)
    if activation == "sigmoid":
        return jax.nn.sigmoid(y)
    return y


def _fused_mlp_kernel(x_ref, *refs, n_layers, activation, compute_dtype):
    """One batch-lane tile through every layer; intermediates stay on-chip.

    Transposed layout: activations are (features_sublane, batch_lane).
    """
    o_ref = refs[-1]
    wb_refs = refs[:-1]                  # [w0^T, b0, w1^T, b1, ...]

    h = x_ref[...]                       # (Din_pad, B_tile), compute_dtype
    for li in range(n_layers):
        wt = wb_refs[2 * li][...]        # (Dout_pad, Din_pad), compute_dtype
        b = wb_refs[2 * li + 1][...]     # (Dout_pad, 1), f32 (lane-broadcast)
        y = jnp.dot(wt, h, preferred_element_type=jnp.float32) + b
        if li < n_layers - 1:            # no activation after the last Linear
            y = _apply_activation(y, activation)
            # Dropout is identity in eval mode.
            h = y.astype(compute_dtype)  # MXU-native operand dtype
        else:
            h = y                        # keep the f32 accumulator for output
    o_ref[...] = h.astype(o_ref.dtype)


def prepare_params(params, compute_dtype=jnp.bfloat16):
    """One-time padding + transposition of the Linear weights/biases.

    Hoisted out of the per-forward hot path.  Weights are stored transposed,
    (out_pad, in_pad), padded only to the sublane packing multiple; they stay
    VMEM-resident inside the kernel.  Returns (prepared_params, output_size).
    Padded weight rows/cols and bias entries are zero, so padded lanes cannot
    leak into real outputs.
    """
    sub = _sublane_multiple(compute_dtype)
    dims = [params[0][0].shape[0]] + [w.shape[1] for w, _ in params]
    pdims = [_pad_up(d, sub) for d in dims]
    prepared = []
    for li, (w, b) in enumerate(params):
        din, dout = w.shape
        wt = jnp.zeros((pdims[li + 1], pdims[li]), compute_dtype)
        wt = wt.at[:dout, :din].set(w.T.astype(compute_dtype))
        bp = jnp.zeros((pdims[li + 1], 1), jnp.float32)
        bp = bp.at[:dout, 0].set(b.astype(jnp.float32))
        prepared.append((wt, bp))
    return tuple(prepared), dims[-1]


@functools.partial(
    jax.jit, static_argnames=("out_features", "activation", "batch_tile")
)
def neural_network_forward(x, prepared, out_features, activation="relu",
                           batch_tile=None):
    """Replicates NeuralNetwork.forward (eval mode) with one fused kernel.

    x: (B, Din) f32.  prepared: output of prepare_params.
    """
    B, Din = x.shape
    n_layers = len(prepared)
    compute_dtype = prepared[0][0].dtype
    pdims = [prepared[0][0].shape[1]] + [wt.shape[0] for wt, _ in prepared]
    din_pad, dout_pad = pdims[0], pdims[-1]

    # Batch lives on LANES: tile must be a multiple of 128.  Use big tiles to
    # amortize per-grid-step overhead, but keep >=2 tiles whenever possible so
    # both v7x TensorCores get work on the "parallel" batch axis.
    if batch_tile is None:
        b128 = _pad_up(B, 128)
        if b128 <= 128:
            batch_tile = 128
        else:
            batch_tile = min(1024, _pad_up(pl.cdiv(b128, 2), 128))
    Bp = _pad_up(B, batch_tile)

    # Lane-dense transposed input: features on sublanes, batch on lanes.
    xt = jnp.zeros((din_pad, Bp), compute_dtype)
    xt = xt.at[:Din, :B].set(x.T.astype(compute_dtype))

    flat_args = [xt]
    in_specs = [pl.BlockSpec((din_pad, batch_tile), lambda i: (0, i))]
    for wt, bp in prepared:
        flat_args += [wt, bp]
        # Constant block indices -> weights/biases stay VMEM-resident and are
        # never re-DMA'd across batch tiles.  (They don't need double-buffering;
        # the default extra buffer is only a few hundred KiB here.)
        in_specs += [
            pl.BlockSpec(wt.shape, lambda i: (0, 0)),
            pl.BlockSpec(bp.shape, lambda i: (0, 0)),
        ]

    itemsize = jnp.dtype(compute_dtype).itemsize
    flops = 2 * Bp * sum(pdims[i] * pdims[i + 1] for i in range(n_layers))
    transcendentals = (
        Bp * sum(pdims[1:-1]) if activation in ("tanh", "sigmoid") else 0
    )
    bytes_accessed = (
        din_pad * Bp * itemsize                          # streamed input
        + dout_pad * Bp * 4                              # streamed f32 output
        + sum(w.size * itemsize + b.size * 4 for w, b in prepared)
    )

    kernel = functools.partial(
        _fused_mlp_kernel,
        n_layers=n_layers,
        activation=activation,
        compute_dtype=compute_dtype,
    )

    out_t = pl.pallas_call(
        kernel,
        out_shape=jax.ShapeDtypeStruct((dout_pad, Bp), jnp.float32),
        grid=(Bp // batch_tile,),
        in_specs=in_specs,
        out_specs=pl.BlockSpec((dout_pad, batch_tile), lambda i: (0, i)),
        compiler_params=pltpu.CompilerParams(
            dimension_semantics=("parallel",),  # shard batch tiles across TCs
        ),
        cost_estimate=pl.CostEstimate(
            flops=flops,
            transcendentals=transcendentals,
            bytes_accessed=bytes_accessed,
        ),
    )(*flat_args)

    # Un-pad / un-transpose the true logits (kept in f32).
    return out_t[:out_features, :B].T


# ---------------- parameter init (matches nn.Linear xavier_uniform_/zeros_) ---


def xavier_uniform(key, fan_in, fan_out):
    bound = math.sqrt(6.0 / (fan_in + fan_out))
    return jax.random.uniform(
        key, (fan_in, fan_out), minval=-bound, maxval=bound, dtype=jnp.float32
    )


def init_params(key, input_size, hidden_layers, output_size):
    dims = [input_size] + list(hidden_layers) + [output_size]
    params = []
    for i in range(len(dims) - 1):
        key, sub = jax.random.split(key)
        w = xavier_uniform(sub, dims[i], dims[i + 1])
        b = jnp.zeros((dims[i + 1],), dtype=jnp.float32)
        params.append((w, b))
    return params


def reference_forward(x, params, activation="relu"):
    n = len(params)
    for i, (w, b) in enumerate(params):
        x = x @ w + b
        if i < n - 1:
            x = _apply_activation(x, activation)
    return x


if __name__ == "__main__":
    # Small shapes consistent with the module's MLP structure.
    batch = 8
    input_size = 32
    hidden_layers = [64, 48]
    output_size = 8

    key = jax.random.PRNGKey(0)
    key_x, key_x2, key_p = jax.random.split(key, 3)

    x = jax.random.normal(key_x, (batch, input_size), dtype=jnp.float32)
    params = init_params(key_p, input_size, hidden_layers, output_size)

    # 1) f32 operands: exact check against the pure-JAX reference.
    prep_f32, out_feat = prepare_params(params, compute_dtype=jnp.float32)
    out = jax.block_until_ready(
        neural_network_forward(x, prep_f32, out_features=out_feat,
                               activation="relu"))
    ref = reference_forward(x, params, activation="relu")
    assert out.shape == (batch, output_size)
    assert jnp.allclose(out, ref, atol=1e-5, rtol=1e-5), "f32 mismatch vs reference"

    # tanh path (exercises the EUP/transcendental branch).
    out_tanh = jax.block_until_ready(
        neural_network_forward(x, prep_f32, out_features=out_feat,
                               activation="tanh"))
    ref_tanh = reference_forward(x, params, activation="tanh")
    assert jnp.allclose(out_tanh, ref_tanh, atol=1e-5, rtol=1e-5), "tanh mismatch"

    # 2) Larger, non-multiple batch exercises the parallel multi-tile grid axis
    #    (B=300 -> 2 tiles of 256 lanes, batch padding sliced off).
    x_big = jax.random.normal(key_x2, (300, input_size), dtype=jnp.float32)
    out_big = jax.block_until_ready(
        neural_network_forward(x_big, prep_f32, out_features=out_feat,
                               activation="relu"))
    ref_big = reference_forward(x_big, params, activation="relu")
    assert out_big.shape == (300, output_size)
    assert jnp.allclose(out_big, ref_big, atol=1e-5, rtol=1e-5), "batched mismatch"

    # 3) bf16 operands / f32 accumulation (default; MXU-native on v6e/v7x).
    prep_bf16, _ = prepare_params(params)   # compute_dtype defaults to bf16
    out_bf16 = jax.block_until_ready(
        neural_network_forward(x_big, prep_bf16, out_features=out_feat,
                               activation="relu"))
    assert jnp.allclose(out_bf16, ref_big, atol=1e-1, rtol=1e-1), "bf16 mismatch"

    print("KERNEL_OK")
</pallas_src>

<mosaic_0001>
module attributes {stable_mosaic.version = 11 : i64} {
  func.func @_fused_mlp_kernel(%arg0: i32, %arg1: memref<32x128xf32, #tpu.memory_space<vmem>>, %arg2: memref<64x32xf32, #tpu.memory_space<vmem>>, %arg3: memref<64x1xf32, #tpu.memory_space<vmem>>, %arg4: memref<48x64xf32, #tpu.memory_space<vmem>>, %arg5: memref<48x1xf32, #tpu.memory_space<vmem>>, %arg6: memref<8x48xf32, #tpu.memory_space<vmem>>, %arg7: memref<8x1xf32, #tpu.memory_space<vmem>>, %arg8: memref<8x128xf32, #tpu.memory_space<vmem>>) attributes {dimension_semantics = [#tpu.dimension_semantics<parallel>], iteration_bounds = array<i64: 1>, scalar_prefetch = 0 : i64, scratch_operands = 0 : i64, tpu.core_type = #tpu.core_type<tc>, window_params = [{transform_indices = @transform_0, window_bounds = array<i64: 32, 128>}, {pipeline_mode = #tpu.pipeline_mode<synchronous>, transform_indices = @transform_1, window_bounds = array<i64: 64, 32>}, {pipeline_mode = #tpu.pipeline_mode<synchronous>, transform_indices = @transform_2, window_bounds = array<i64: 64, 1>}, {pipeline_mode = #tpu.pipeline_mode<synchronous>, transform_indices = @transform_3, window_bounds = array<i64: 48, 64>}, {pipeline_mode = #tpu.pipeline_mode<synchronous>, transform_indices = @transform_4, window_bounds = array<i64: 48, 1>}, {pipeline_mode = #tpu.pipeline_mode<synchronous>, transform_indices = @transform_5, window_bounds = array<i64: 8, 48>}, {pipeline_mode = #tpu.pipeline_mode<synchronous>, transform_indices = @transform_6, window_bounds = array<i64: 8, 1>}, {transform_indices = @transform_7, window_bounds = array<i64: 8, 128>}]} {
    %c0 = arith.constant 0 : index
    %c0_0 = arith.constant 0 : index
    %0 = vector.load %arg1[%c0, %c0_0] : memref<32x128xf32, #tpu.memory_space<vmem>>, vector<32x128xf32>
    %c0_1 = arith.constant 0 : index
    %c0_2 = arith.constant 0 : index
    %1 = vector.load %arg2[%c0_1, %c0_2] : memref<64x32xf32, #tpu.memory_space<vmem>>, vector<64x32xf32>
    %c0_3 = arith.constant 0 : index
    %c0_4 = arith.constant 0 : index
    %2 = vector.load %arg3[%c0_3, %c0_4] : memref<64x1xf32, #tpu.memory_space<vmem>>, vector<64x1xf32>
    %cst = arith.constant dense<0.000000e+00> : vector<64x128xf32>
    %3 = tpu.matmul %1, %0, %cst {dimension_numbers = #tpu.dot_dimension_numbers<[1], [0], [0], [1], [0, 0, 1, 1], [], []>} : vector<64x32xf32>, vector<32x128xf32>, vector<64x128xf32> -> vector<64x128xf32>
    %4 = vector.broadcast %2 : vector<64x1xf32> to vector<64x128xf32>
    %5 = arith.addf %3, %4 : vector<64x128xf32>
    %cst_5 = arith.constant 0.000000e+00 : f32
    %6 = vector.broadcast %cst_5 : f32 to vector<64x128xf32>
    %7 = arith.maximumf %5, %6 : vector<64x128xf32>
    %c0_6 = arith.constant 0 : index
    %c0_7 = arith.constant 0 : index
    %8 = vector.load %arg4[%c0_6, %c0_7] : memref<48x64xf32, #tpu.memory_space<vmem>>, vector<48x64xf32>
    %c0_8 = arith.constant 0 : index
    %c0_9 = arith.constant 0 : index
    %9 = vector.load %arg5[%c0_8, %c0_9] : memref<48x1xf32, #tpu.memory_space<vmem>>, vector<48x1xf32>
    %cst_10 = arith.constant dense<0.000000e+00> : vector<48x128xf32>
    %10 = tpu.matmul %8, %7, %cst_10 {dimension_numbers = #tpu.dot_dimension_numbers<[1], [0], [0], [1], [0, 0, 1, 1], [], []>} : vector<48x64xf32>, vector<64x128xf32>, vector<48x128xf32> -> vector<48x128xf32>
    %11 = vector.broadcast %9 : vector<48x1xf32> to vector<48x128xf32>
    %12 = arith.addf %10, %11 : vector<48x128xf32>
    %cst_11 = arith.constant 0.000000e+00 : f32
    %13 = vector.broadcast %cst_11 : f32 to vector<48x128xf32>
    %14 = arith.maximumf %12, %13 : vector<48x128xf32>
    %c0_12 = arith.constant 0 : index
    %c0_13 = arith.constant 0 : index
    %15 = vector.load %arg6[%c0_12, %c0_13] : memref<8x48xf32, #tpu.memory_space<vmem>>, vector<8x48xf32>
    %c0_14 = arith.constant 0 : index
    %c0_15 = arith.constant 0 : index
    %16 = vector.load %arg7[%c0_14, %c0_15] : memref<8x1xf32, #tpu.memory_space<vmem>>, vector<8x1xf32>
    %cst_16 = arith.constant dense<0.000000e+00> : vector<8x128xf32>
    %17 = tpu.matmul %15, %14, %cst_16 {dimension_numbers = #tpu.dot_dimension_numbers<[1], [0], [0], [1], [0, 0, 1, 1], [], []>} : vector<8x48xf32>, vector<48x128xf32>, vector<8x128xf32> -> vector<8x128xf32>
    %18 = vector.broadcast %16 : vector<8x1xf32> to vector<8x128xf32>
    %19 = arith.addf %17, %18 : vector<8x128xf32>
    %c0_17 = arith.constant 0 : index
    %c0_18 = arith.constant 0 : index
    %20 = vector.load %arg8[%c0_17, %c0_18] : memref<8x128xf32, #tpu.memory_space<vmem>>, vector<8x128xf32>
    tpu.vector_store %arg8[%c0_17, %c0_18], %19 {strides = array<i32>} : memref<8x128xf32, #tpu.memory_space<vmem>>, vector<8x128xf32>,
    return
  }
  func.func @transform_0(%arg0: i32) -> (i32, i32) {
    %c0_i32 = arith.constant 0 : i32
    %c0_i32_0 = arith.constant 0 : i32
    return %c0_i32, %arg0 : i32, i32
  }
  func.func @transform_1(%arg0: i32) -> (i32, i32) {
    %c0_i32 = arith.constant 0 : i32
    %c0_i32_0 = arith.constant 0 : i32
    %c0_i32_1 = arith.constant 0 : i32
    return %c0_i32, %c0_i32_0 : i32, i32
  }
  func.func @transform_2(%arg0: i32) -> (i32, i32) {
    %c0_i32 = arith.constant 0 : i32
    %c0_i32_0 = arith.constant 0 : i32
    %c0_i32_1 = arith.constant 0 : i32
    return %c0_i32, %c0_i32_0 : i32, i32
  }
  func.func @transform_3(%arg0: i32) -> (i32, i32) {
    %c0_i32 = arith.constant 0 : i32
    %c0_i32_0 = arith.constant 0 : i32
    %c0_i32_1 = arith.constant 0 : i32
    return %c0_i32, %c0_i32_0 : i32, i32
  }
  func.func @transform_4(%arg0: i32) -> (i32, i32) {
    %c0_i32 = arith.constant 0 : i32
    %c0_i32_0 = arith.constant 0 : i32
    %c0_i32_1 = arith.constant 0 : i32
    return %c0_i32, %c0_i32_0 : i32, i32
  }
  func.func @transform_5(%arg0: i32) -> (i32, i32) {
    %c0_i32 = arith.constant 0 : i32
    %c0_i32_0 = arith.constant 0 : i32
    %c0_i32_1 = arith.constant 0 : i32
    return %c0_i32, %c0_i32_0 : i32, i32
  }
  func.func @transform_6(%arg0: i32) -> (i32, i32) {
    %c0_i32 = arith.constant 0 : i32
    %c0_i32_0 = arith.constant 0 : i32
    %c0_i32_1 = arith.constant 0 : i32
    return %c0_i32, %c0_i32_0 : i32, i32
  }
  func.func @transform_7(%arg0: i32) -> (i32, i32) {
    %c0_i32 = arith.constant 0 : i32
    %c0_i32_0 = arith.constant 0 : i32
    return %c0_i32, %arg0 : i32, i32
  }
}

</mosaic_0001>

<llo_original>
// kernel: neural_network_forward.1
$region0: #{neural_network_forward.1}
  #allocation0 [shape = 'u32[]', space=smem, size = 0x4, offset = 0x4, fixed_abs, tag = 'smem constant byte address 0x4 - core index']
  #allocation1 [shape = 'u32[144,128]{1,0:T(1,128)}', space=vmem, size = 0x12000, scoped, tag = 'internal scratch']
  %s0 = inlined_call_operand.vmem [shape: f32[32,128], index: 0, kind: input, shape index: {}]
  %s1 = inlined_call_operand.vmem [shape: f32[64,32], index: 1, kind: input, shape index: {}]
  %s2 = inlined_call_operand.vmem [shape: f32[64,1], index: 2, kind: input, shape index: {}]
  %s3 = inlined_call_operand.vmem [shape: f32[48,64], index: 3, kind: input, shape index: {}]
  %s4 = inlined_call_operand.vmem [shape: f32[48,1], index: 4, kind: input, shape index: {}]
  %s5 = inlined_call_operand.vmem [shape: f32[8,48], index: 5, kind: input, shape index: {}]
  %s6 = inlined_call_operand.vmem [shape: f32[8,1], index: 6, kind: input, shape index: {}]
  %s7 = inlined_call_operand.vmem [shape: f32[8,128], index: 7, kind: output, shape index: {}]
  %s8 = sld [smem:[#allocation0]]
  $region38: #{neural_network_forward.1} parent=0
    _
  %s10 = ssub.s32 1, %s8
  %s11 = scalar_select 0, %s10, %s8
  // Predicated region
  $region2: #{neural_network_forward.1} parent=0 // pred_check
    _
  $region3: #{neural_network_forward.1} parent=0 // pred_check_branch
    %13 = sbr.rel (0) target = $region5
  $region4: #{neural_network_forward.1} parent=0 // pred_region
    _
  $region5: #{neural_network_forward.1} parent=0 // pred_fallthru
    _
  // Predicated region
  $region6: #{neural_network_forward.1} parent=0 // pred_check
    _
  $region7: #{neural_network_forward.1} parent=0 // pred_check_branch
    %15 = sbr.rel (0) target = $region9
  $region8: #{neural_network_forward.1} parent=0 // pred_region
    _
  $region9: #{neural_network_forward.1} parent=0 // pred_fallthru
    _
  // Predicated region
  $region10: #{neural_network_forward.1} parent=0 // pred_check
    _
  $region11: #{neural_network_forward.1} parent=0 // pred_check_branch
    %17 = sbr.rel (0) target = $region13
  $region12: #{neural_network_forward.1} parent=0 // pred_region
    _
  $region13: #{neural_network_forward.1} parent=0 // pred_fallthru
    _
  // Predicated region
  $region14: #{neural_network_forward.1} parent=0 // pred_check
    _
  $region15: #{neural_network_forward.1} parent=0 // pred_check_branch
    %19 = sbr.rel (0) target = $region17
  $region16: #{neural_network_forward.1} parent=0 // pred_region
    _
  $region17: #{neural_network_forward.1} parent=0 // pred_fallthru
    _
  // Predicated region
  $region18: #{neural_network_forward.1} parent=0 // pred_check
    _
  $region19: #{neural_network_forward.1} parent=0 // pred_check_branch
    %21 = sbr.rel (0) target = $region21
  $region20: #{neural_network_forward.1} parent=0 // pred_region
    _
  $region21: #{neural_network_forward.1} parent=0 // pred_fallthru
    _
  // Predicated region
  $region22: #{neural_network_forward.1} parent=0 // pred_check
    _
  $region23: #{neural_network_forward.1} parent=0 // pred_check_branch
    %23 = sbr.rel (0) target = $region25
  $region24: #{neural_network_forward.1} parent=0 // pred_region
    _
  $region25: #{neural_network_forward.1} parent=0 // pred_fallthru
    _
  // Predicated region
  $region26: #{neural_network_forward.1} parent=0 // pred_check
    _
  $region27: #{neural_network_forward.1} parent=0 // pred_check_branch
    %25 = sbr.rel (0) target = $region29
  $region28: #{neural_network_forward.1} parent=0 // pred_region
    _
  $region29: #{neural_network_forward.1} parent=0 // pred_fallthru
    _
  %v26 = vld [vmem:[%s0] sm:$0xff]
  %v27 = vld [vmem:[%s0 + $0x8] sm:$0xff]
  %v28 = vld [vmem:[%s0 + $0x10] sm:$0xff]
  %v29 = vld [vmem:[%s0 + $0x18] sm:$0xff]
  %v30 = vld [vmem:[%s1] sm:$0xff]
  %v31 = vld [vmem:[%s1 + $0x8] sm:$0xff]
  %v32 = vld [vmem:[%s1 + $0x10] sm:$0xff]
  %v33 = vld [vmem:[%s1 + $0x18] sm:$0xff]
  %v34 = vld [vmem:[%s1 + $0x20] sm:$0xff]
  %v35 = vld [vmem:[%s1 + $0x28] sm:$0xff]
  %v36 = vld [vmem:[%s1 + $0x30] sm:$0xff]
  %v37 = vld [vmem:[%s1 + $0x38] sm:$0xff]
  %v38 = vld [vmem:[%s2] sm:$0xff]
  %v39 = vld [vmem:[%s2 + $0x8] sm:$0xff]
  %v40 = vld [vmem:[%s2 + $0x10] sm:$0xff]
  %v41 = vld [vmem:[%s2 + $0x18] sm:$0xff]
  %v42 = vld [vmem:[%s2 + $0x20] sm:$0xff]
  %v43 = vld [vmem:[%s2 + $0x28] sm:$0xff]
  %v44 = vld [vmem:[%s2 + $0x30] sm:$0xff]
  %v45 = vld [vmem:[%s2 + $0x38] sm:$0xff]
  %47 = vset.pattern.permute.xlu0 0
  %48 = vperm.xlu0 %47, %v38
  %v49 = vpop.permute.xlu0 %48
  %52 = vset.pattern.permute.xlu0 0
  %53 = vperm.xlu0 %52, %v39
  %v54 = vpop.permute.xlu0 %53
  %57 = vset.pattern.permute.xlu0 0
  %58 = vperm.xlu0 %57, %v40
  %v59 = vpop.permute.xlu0 %58
  %62 = vset.pattern.permute.xlu0 0
  %63 = vperm.xlu0 %62, %v41
  %v64 = vpop.permute.xlu0 %63
  %67 = vset.pattern.permute.xlu0 0
  %68 = vperm.xlu0 %67, %v42
  %v69 = vpop.permute.xlu0 %68
  %72 = vset.pattern.permute.xlu0 0
  %73 = vperm.xlu0 %72, %v43
  %v74 = vpop.permute.xlu0 %73
  %77 = vset.pattern.permute.xlu0 0
  %78 = vperm.xlu0 %77, %v44
  %v79 = vpop.permute.xlu0 %78
  %82 = vset.pattern.permute.xlu0 0
  %83 = vperm.xlu0 %82, %v45
  %v84 = vpop.permute.xlu0 %83
  %vm86 = vcmask 261120
  %v88 = vsel %vm86, %v30, 0
  %v91 = vsel %vm86, %v31, 0
  %v94 = vsel %vm86, %v32, 0
  %v97 = vsel %vm86, %v33, 0
  %v100 = vsel %vm86, %v34, 0
  %v103 = vsel %vm86, %v35, 0
  %v106 = vsel %vm86, %v36, 0
  %v109 = vsel %vm86, %v37, 0
  %111 = vmatprep.subr.mxu0 0.0
  %112 = vmatpush1.msra.mxu0 %v26
  %113 = vmatprep.subr.mxu0 0.0
  %114 = vmatpush1.msra.mxu0 %v27
  %115 = vmatprep.subr.mxu0 0.0
  %116 = vmatpush1.msra.mxu0 %v28
  %117 = vmatprep.subr.mxu0 0.0
  %118 = vmatpush1.msra.mxu0 %v29
  %119 = vmatprep.subr.mxu0 0.0
  %120 = vmatpush1.msra.mxu0 0.0
  %121 = vmatprep.subr.mxu0 0.0
  %122 = vmatpush1.msra.mxu0 0.0
  %123 = vmatprep.subr.mxu0 0.0
  %124 = vmatpush1.msra.mxu0 0.0
  %125 = vmatprep.subr.mxu0 0.0
  %126 = vmatpush1.msra.mxu0 0.0
  %127 = vmatprep.subr.mxu0 0.0
  %128 = vmatpush1.msra.mxu0 0.0
  %129 = vmatprep.subr.mxu0 0.0
  %130 = vmatpush1.msra.mxu0 0.0
  %131 = vmatprep.subr.mxu0 0.0
  %132 = vmatpush1.msra.mxu0 0.0
  %133 = vmatprep.subr.mxu0 0.0
  %134 = vmatpush1.msra.mxu0 0.0
  %135 = vmatprep.subr.mxu0 0.0
  %136 = vmatpush1.msra.mxu0 0.0
  %137 = vmatprep.subr.mxu0 0.0
  %138 = vmatpush1.msra.mxu0 0.0
  %139 = vmatprep.subr.mxu0 0.0
  %140 = vmatpush1.msra.mxu0 0.0
  %141 = vmatprep.subr.mxu0 0.0
  %142 = vmatpush1.msra.mxu0 0.0
  %143 = vmatprep.subr.mxu0 0.0
  %144 = vmatpush1.msra.mxu0 0.0
  %145 = vmatprep.subr.mxu0 0.0
  %146 = vmatpush1.msra.mxu0 0.0
  %147 = vmatprep.subr.mxu0 0.0
  %148 = vmatpush1.msra.mxu0 0.0
  %149 = vmatprep.subr.mxu0 0.0
  %150 = vmatpush1.msra.mxu0 0.0
  %151 = vmatprep.subr.mxu0 0.0
  %152 = vmatpush1.msra.mxu0 0.0
  %153 = vmatprep.subr.mxu0 0.0
  %154 = vmatpush1.msra.mxu0 0.0
  %155 = vmatprep.subr.mxu0 0.0
  %156 = vmatpush1.msra.mxu0 0.0
  %157 = vmatprep.subr.mxu0 0.0
  %158 = vmatpush1.msra.mxu0 0.0
  %159 = vmatprep.subr.mxu0 0.0
  %160 = vmatpush1.msra.mxu0 0.0
  %161 = vmatprep.subr.mxu0 0.0
  %162 = vmatpush1.msra.mxu0 0.0
  %163 = vmatprep.subr.mxu0 0.0
  %164 = vmatpush1.msra.mxu0 0.0
  %165 = vmatprep.subr.mxu0 0.0
  %166 = vmatpush1.msra.mxu0 0.0
  %167 = vmatprep.subr.mxu0 0.0
  %168 = vmatpush1.msra.mxu0 0.0
  %169 = vmatprep.subr.mxu0 0.0
  %170 = vmatpush1.msra.mxu0 0.0
  %171 = vmatprep.subr.mxu0 0.0
  %172 = vmatpush1.msra.mxu0 0.0
  %173 = vmatprep.subr.mxu0 0.0
  %174 = vmatpush1.msra.mxu0 0.0
  %175 = vmatprep.mubr.f32.mxu0 0.0
  %176 = vmatmul.mubr.f32.gmra.mrb[0].mxu0 %v88
  %v177 = vpop.f32.mrb[0].mxu0
  %v178 = vadd.f32 %v49, %v177
  %v179 = vpop.f32.mrb[0].mxu0
  %180 = vmatprep.mubr.f32.mxu0 0.0
  %181 = vmatmul.mubr.f32.gmra.mrb[0].mxu0 %v91
  %v182 = vpop.f32.mrb[0].mxu0
  %v183 = vadd.f32 %v54, %v182
  %v184 = vpop.f32.mrb[0].mxu0
  %185 = vmatprep.mubr.f32.mxu0 0.0
  %186 = vmatmul.mubr.f32.gmra.mrb[0].mxu0 %v94
  %v187 = vpop.f32.mrb[0].mxu0
  %v188 = vadd.f32 %v59, %v187
  %v189 = vpop.f32.mrb[0].mxu0
  %190 = vmatprep.mubr.f32.mxu0 0.0
  %191 = vmatmul.mubr.f32.gmra.mrb[0].mxu0 %v97
  %v192 = vpop.f32.mrb[0].mxu0
  %v193 = vadd.f32 %v64, %v192
  %v194 = vpop.f32.mrb[0].mxu0
  %195 = vmatprep.mubr.f32.mxu0 0.0
  %196 = vmatmul.mubr.f32.gmra.mrb[0].mxu0 %v100
  %v197 = vpop.f32.mrb[0].mxu0
  %v198 = vadd.f32 %v69, %v197
  %v199 = vpop.f32.mrb[0].mxu0
  %200 = vmatprep.mubr.f32.mxu0 0.0
  %201 = vmatmul.mubr.f32.gmra.mrb[0].mxu0 %v103
  %v202 = vpop.f32.mrb[0].mxu0
  %v203 = vadd.f32 %v74, %v202
  %v204 = vpop.f32.mrb[0].mxu0
  %205 = vmatprep.mubr.f32.mxu0 0.0
  %206 = vmatmul.mubr.f32.gmra.mrb[0].mxu0 %v106
  %v207 = vpop.f32.mrb[0].mxu0
  %v208 = vadd.f32 %v79, %v207
  %v209 = vpop.f32.mrb[0].mxu0
  %210 = vmatprep.mubr.f32.mxu0 0.0
  %211 = vmatmul.mubr.f32.gmra.mrb[0].mxu0 %v109
  %v212 = vpop.f32.mrb[0].mxu0
  %v213 = vadd.f32 %v84, %v212
  %v214 = vpop.f32.mrb[0].mxu0
  %215 = vdwg.mxu0
  %v216 = vmax.f32 %v178, 0.0
  %v217 = vmax.f32 %v183, 0.0
  %v218 = vmax.f32 %v188, 0.0
  %v219 = vmax.f32 %v193, 0.0
  %v220 = vmax.f32 %v198, 0.0
  %v221 = vmax.f32 %v203, 0.0
  %v222 = vmax.f32 %v208, 0.0
  %v223 = vmax.f32 %v213, 0.0
  %v224 = vld [vmem:[%s3] sm:$0xff]
  %v225 = vld [vmem:[%s3 + $0x8] sm:$0xff]
  %v226 = vld [vmem:[%s3 + $0x10] sm:$0xff]
  %v227 = vld [vmem:[%s3 + $0x18] sm:$0xff]
  %v228 = vld [vmem:[%s3 + $0x20] sm:$0xff]
  %v229 = vld [vmem:[%s3 + $0x28] sm:$0xff]
  %v230 = vld [vmem:[%s4] sm:$0xff]
  %v231 = vld [vmem:[%s4 + $0x8] sm:$0xff]
  %v232 = vld [vmem:[%s4 + $0x10] sm:$0xff]
  %v233 = vld [vmem:[%s4 + $0x18] sm:$0xff]
  %v234 = vld [vmem:[%s4 + $0x20] sm:$0xff]
  %v235 = vld [vmem:[%s4 + $0x28] sm:$0xff]
  %237 = vset.pattern.permute.xlu0 0
  %238 = vperm.xlu0 %237, %v230
  %v239 = vpop.permute.xlu0 %238
  %242 = vset.pattern.permute.xlu0 0
  %243 = vperm.xlu0 %242, %v231
  %v244 = vpop.permute.xlu0 %243
  %247 = vset.pattern.permute.xlu0 0
  %248 = vperm.xlu0 %247, %v232
  %v249 = vpop.permute.xlu0 %248
  %252 = vset.pattern.permute.xlu0 0
  %253 = vperm.xlu0 %252, %v233
  %v254 = vpop.permute.xlu0 %253
  %257 = vset.pattern.permute.xlu0 0
  %258 = vperm.xlu0 %257, %v234
  %v259 = vpop.permute.xlu0 %258
  %262 = vset.pattern.permute.xlu0 0
  %263 = vperm.xlu0 %262, %v235
  %v264 = vpop.permute.xlu0 %263
  %vm266 = vcmask 523264
  %v268 = vsel %vm266, %v224, 0
  %v271 = vsel %vm266, %v225, 0
  %v274 = vsel %vm266, %v226, 0
  %v277 = vsel %vm266, %v227, 0
  %v280 = vsel %vm266, %v228, 0
  %v283 = vsel %vm266, %v229, 0
  %285 = vmatprep.subr.mxu0 0.0
  %286 = vmatpush1.msra.mxu0 %v216
  %287 = vmatprep.subr.mxu0 0.0
  %288 = vmatpush1.msra.mxu0 %v217
  %289 = vmatprep.subr.mxu0 0.0
  %290 = vmatpush1.msra.mxu0 %v218
  %291 = vmatprep.subr.mxu0 0.0
  %292 = vmatpush1.msra.mxu0 %v219
  %293 = vmatprep.subr.mxu0 0.0
  %294 = vmatpush1.msra.mxu0 %v220
  %295 = vmatprep.subr.mxu0 0.0
  %296 = vmatpush1.msra.mxu0 %v221
  %297 = vmatprep.subr.mxu0 0.0
  %298 = vmatpush1.msra.mxu0 %v222
  %299 = vmatprep.subr.mxu0 0.0
  %300 = vmatpush1.msra.mxu0 %v223
  %301 = vmatprep.subr.mxu0 0.0
  %302 = vmatpush1.msra.mxu0 0.0
  %303 = vmatprep.subr.mxu0 0.0
  %304 = vmatpush1.msra.mxu0 0.0
  %305 = vmatprep.subr.mxu0 0.0
  %306 = vmatpush1.msra.mxu0 0.0
  %307 = vmatprep.subr.mxu0 0.0
  %308 = vmatpush1.msra.mxu0 0.0
  %309 = vmatprep.subr.mxu0 0.0
  %310 = vmatpush1.msra.mxu0 0.0
  %311 = vmatprep.subr.mxu0 0.0
  %312 = vmatpush1.msra.mxu0 0.0
  %313 = vmatprep.subr.mxu0 0.0
  %314 = vmatpush1.msra.mxu0 0.0
  %315 = vmatprep.subr.mxu0 0.0
  %316 = vmatpush1.msra.mxu0 0.0
  %317 = vmatprep.subr.mxu0 0.0
  %318 = vmatpush1.msra.mxu0 0.0
  %319 = vmatprep.subr.mxu0 0.0
  %320 = vmatpush1.msra.mxu0 0.0
  %321 = vmatprep.subr.mxu0 0.0
  %322 = vmatpush1.msra.mxu0 0.0
  %323 = vmatprep.subr.mxu0 0.0
  %324 = vmatpush1.msra.mxu0 0.0
  %325 = vmatprep.subr.mxu0 0.0
  %326 = vmatpush1.msra.mxu0 0.0
  %327 = vmatprep.subr.mxu0 0.0
  %328 = vmatpush1.msra.mxu0 0.0
  %329 = vmatprep.subr.mxu0 0.0
  %330 = vmatpush1.msra.mxu0 0.0
  %331 = vmatprep.subr.mxu0 0.0
  %332 = vmatpush1.msra.mxu0 0.0
  %333 = vmatprep.subr.mxu0 0.0
  %334 = vmatpush1.msra.mxu0 0.0
  %335 = vmatprep.subr.mxu0 0.0
  %336 = vmatpush1.msra.mxu0 0.0
  %337 = vmatprep.subr.mxu0 0.0
  %338 = vmatpush1.msra.mxu0 0.0
  %339 = vmatprep.subr.mxu0 0.0
  %340 = vmatpush1.msra.mxu0 0.0
  %341 = vmatprep.subr.mxu0 0.0
  %342 = vmatpush1.msra.mxu0 0.0
  %343 = vmatprep.subr.mxu0 0.0
  %344 = vmatpush1.msra.mxu0 0.0
  %345 = vmatprep.subr.mxu0 0.0
  %346 = vmatpush1.msra.mxu0 0.0
  %347 = vmatprep.subr.mxu0 0.0
  %348 = vmatpush1.msra.mxu0 0.0
  %349 = vmatprep.mubr.f32.mxu0 0.0
  %350 = vmatmul.mubr.f32.gmra.mrb[0].mxu0 %v268
  %v351 = vpop.f32.mrb[0].mxu0
  %v352 = vadd.f32 %v239, %v351
  %v353 = vpop.f32.mrb[0].mxu0
  %354 = vmatprep.mubr.f32.mxu0 0.0
  %355 = vmatmul.mubr.f32.gmra.mrb[0].mxu0 %v271
  %v356 = vpop.f32.mrb[0].mxu0
  %v357 = vadd.f32 %v244, %v356
  %v358 = vpop.f32.mrb[0].mxu0
  %359 = vmatprep.mubr.f32.mxu0 0.0
  %360 = vmatmul.mubr.f32.gmra.mrb[0].mxu0 %v274
  %v361 = vpop.f32.mrb[0].mxu0
  %v362 = vadd.f32 %v249, %v361
  %v363 = vpop.f32.mrb[0].mxu0
  %364 = vmatprep.mubr.f32.mxu0 0.0
  %365 = vmatmul.mubr.f32.gmra.mrb[0].mxu0 %v277
  %v366 = vpop.f32.mrb[0].mxu0
  %v367 = vadd.f32 %v254, %v366
  %v368 = vpop.f32.mrb[0].mxu0
  %369 = vmatprep.mubr.f32.mxu0 0.0
  %370 = vmatmul.mubr.f32.gmra.mrb[0].mxu0 %v280
  %v371 = vpop.f32.mrb[0].mxu0
  %v372 = vadd.f32 %v259, %v371
  %v373 = vpop.f32.mrb[0].mxu0
  %374 = vmatprep.mubr.f32.mxu0 0.0
  %375 = vmatmul.mubr.f32.gmra.mrb[0].mxu0 %v283
  %v376 = vpop.f32.mrb[0].mxu0
  %v377 = vadd.f32 %v264, %v376
  %v378 = vpop.f32.mrb[0].mxu0
  %379 = vdwg.mxu0
  %v380 = vmax.f32 %v352, 0.0
  %v381 = vmax.f32 %v357, 0.0
  %v382 = vmax.f32 %v362, 0.0
  %v383 = vmax.f32 %v367, 0.0
  %v384 = vmax.f32 %v372, 0.0
  %v385 = vmax.f32 %v377, 0.0
  %v386 = vld [vmem:[%s5] sm:$0xff]
  %v387 = vld [vmem:[%s6] sm:$0xff]
  %389 = vset.pattern.permute.xlu0 0
  %390 = vperm.xlu0 %389, %v387
  %v391 = vpop.permute.xlu0 %390
  %vm393 = vcmask 392192
  %v395 = vsel %vm393, %v386, 0
  %397 = vmatprep.subr.mxu0 0.0
  %398 = vmatpush1.msra.mxu0 %v380
  %399 = vmatprep.subr.mxu0 0.0
  %400 = vmatpush1.msra.mxu0 %v381
  %401 = vmatprep.subr.mxu0 0.0
  %402 = vmatpush1.msra.mxu0 %v382
  %403 = vmatprep.subr.mxu0 0.0
  %404 = vmatpush1.msra.mxu0 %v383
  %405 = vmatprep.subr.mxu0 0.0
  %406 = vmatpush1.msra.mxu0 %v384
  %407 = vmatprep.subr.mxu0 0.0
  %408 = vmatpush1.msra.mxu0 %v385
  %409 = vmatprep.subr.mxu0 0.0
  %410 = vmatpush1.msra.mxu0 0.0
  %411 = vmatprep.subr.mxu0 0.0
  %412 = vmatpush1.msra.mxu0 0.0
  %413 = vmatprep.subr.mxu0 0.0
  %414 = vmatpush1.msra.mxu0 0.0
  %415 = vmatprep.subr.mxu0 0.0
  %416 = vmatpush1.msra.mxu0 0.0
  %417 = vmatprep.subr.mxu0 0.0
  %418 = vmatpush1.msra.mxu0 0.0
  %419 = vmatprep.subr.mxu0 0.0
  %420 = vmatpush1.msra.mxu0 0.0
  %421 = vmatprep.subr.mxu0 0.0
  %422 = vmatpush1.msra.mxu0 0.0
  %423 = vmatprep.subr.mxu0 0.0
  %424 = vmatpush1.msra.mxu0 0.0
  %425 = vmatprep.subr.mxu0 0.0
  %426 = vmatpush1.msra.mxu0 0.0
  %427 = vmatprep.subr.mxu0 0.0
  %428 = vmatpush1.msra.mxu0 0.0
  %429 = vmatprep.subr.mxu0 0.0
  %430 = vmatpush1.msra.mxu0 0.0
  %431 = vmatprep.subr.mxu0 0.0
  %432 = vmatpush1.msra.mxu0 0.0
  %433 = vmatprep.subr.mxu0 0.0
  %434 = vmatpush1.msra.mxu0 0.0
  %435 = vmatprep.subr.mxu0 0.0
  %436 = vmatpush1.msra.mxu0 0.0
  %437 = vmatprep.subr.mxu0 0.0
  %438 = vmatpush1.msra.mxu0 0.0
  %439 = vmatprep.subr.mxu0 0.0
  %440 = vmatpush1.msra.mxu0 0.0
  %441 = vmatprep.subr.mxu0 0.0
  %442 = vmatpush1.msra.mxu0 0.0
  %443 = vmatprep.subr.mxu0 0.0
  %444 = vmatpush1.msra.mxu0 0.0
  %445 = vmatprep.subr.mxu0 0.0
  %446 = vmatpush1.msra.mxu0 0.0
  %447 = vmatprep.subr.mxu0 0.0
  %448 = vmatpush1.msra.mxu0 0.0
  %449 = vmatprep.subr.mxu0 0.0
  %450 = vmatpush1.msra.mxu0 0.0
  %451 = vmatprep.subr.mxu0 0.0
  %452 = vmatpush1.msra.mxu0 0.0
  %453 = vmatprep.subr.mxu0 0.0
  %454 = vmatpush1.msra.mxu0 0.0
  %455 = vmatprep.subr.mxu0 0.0
  %456 = vmatpush1.msra.mxu0 0.0
  %457 = vmatprep.subr.mxu0 0.0
  %458 = vmatpush1.msra.mxu0 0.0
  %459 = vmatprep.subr.mxu0 0.0
  %460 = vmatpush1.msra.mxu0 0.0
  %461 = vmatprep.mubr.f32.mxu0 0.0
  %462 = vmatmul.mubr.f32.gmra.mrb[0].mxu0 %v395
  %v463 = vpop.f32.mrb[0].mxu0
  %v464 = vadd.f32 %v391, %v463
  %v465 = vpop.f32.mrb[0].mxu0
  %466 = vdwg.mxu0
  %467 = vst [vmem:[%s7] sm:$0xff] %v464
  // Predicated region
  $region30: #{neural_network_forward.1} parent=0 // pred_check
    _
  $region31: #{neural_network_forward.1} parent=0 // pred_check_branch
    %469 = sbr.rel (0) target = $region33
  $region32: #{neural_network_forward.1} parent=0 // pred_region
    _
  $region33: #{neural_network_forward.1} parent=0 // pred_fallthru
    _
  // Predicated region
  $region34: #{neural_network_forward.1} parent=0 // pred_check
    _
  $region35: #{neural_network_forward.1} parent=0 // pred_check_branch
    %471 = sbr.rel (0) target = $region37
  $region36: #{neural_network_forward.1} parent=0 // pred_region
    _
  $region37: #{neural_network_forward.1} parent=0 // pred_fallthru
    _

</llo_original>
